<compile_context>
chip_gen: v7x
topology: tpu7x:2x2x1
jax: 0.10.0
libtpu: 0.0.40
codegen_flags: <defaults>
</compile_context>

<pallas_src>
import functools

import jax
import jax.numpy as jnp
from jax.experimental import pallas as pl
from jax.experimental.pallas import tpu as pltpu


def _ceil_to(v, m):
    return ((v + m - 1) // m) * m


def _vmem_bytes(rows, cols, itemsize):
    """Lane/sublane-padding-aware VMEM footprint of a (rows, cols) buffer."""
    return _ceil_to(max(rows, 1), 8) * _ceil_to(max(cols, 1), 128) * itemsize


def _vmem_capacity_bytes():
    try:
        return int(pltpu.get_tpu_info().vmem_capacity_bytes)
    except Exception:
        return 64 << 20  # conservative: v7x per-TensorCore VMEM


try:
    _BUFFERED3 = pl.Buffered(3)  # triple-buffer the x stream (hide DMA bubbles)
except Exception:                # older jax without pl.Buffered
    _BUFFERED3 = None


# -----------------------------------------------------------------------------
# Phase 1: inner first linear + ReLU + mean over the inner set (tiled over rows)
# -----------------------------------------------------------------------------
def _inner_kernel(x_ref, w1_ref, b1_ref, spre_ref):
    # x_ref: (sets_per_tile*N, D) cdt, w1_ref: (D, H1p) cdt, b1_ref: (1, H1p) f32
    # spre_ref: (sets_per_tile, H1p) cdt
    h = jnp.dot(x_ref[...], w1_ref[...], preferred_element_type=jnp.float32)
    h = jnp.maximum(h + b1_ref[...], 0.0)            # bias + ReLU in f32
    t = spre_ref.shape[0]
    n = h.shape[0] // t
    # mean over the inner set: pure sublane reduce (layout-free when N % 8 == 0)
    spre_ref[...] = jnp.mean(h.reshape(t, n, h.shape[-1]), axis=1
                             ).astype(spre_ref.dtype)


# -----------------------------------------------------------------------------
# Phase 2: hoisted second inner linear, SetBatchNorm, outer MLP, head (tiny)
# -----------------------------------------------------------------------------
def _outer_kernel(spre_ref, w2i_ref, b2i_ref, gamma_ref, beta_ref,
                  w1o_ref, b1o_ref, w2o_ref, b2o_ref, wd_ref, bd_ref,
                  out_ref, *, outer_m):
    cdt = w2i_ref.dtype
    # second inner linear, applied after the inner-set mean (commutes)
    s = jnp.dot(spre_ref[...], w2i_ref[...],
                preferred_element_type=jnp.float32) + b2i_ref[...]
    # SetBatchNorm == BatchNorm2d(1) in training mode: global batch stats over
    # all (B, M, H1) elements, biased variance, centered form.
    mu = jnp.mean(s)
    var = jnp.mean((s - mu) ** 2)
    s = (s - mu) * jax.lax.rsqrt(var + 1e-5) * gamma_ref[0, 0] + beta_ref[0, 0]
    # outer transform with the outer-set mean hoisted before its second linear
    g = jnp.maximum(
        jnp.dot(s.astype(cdt), w1o_ref[...],
                preferred_element_type=jnp.float32) + b1o_ref[...], 0.0)
    b = out_ref.shape[0]
    z = jnp.mean(g.reshape(b, outer_m, g.shape[-1]), axis=1)
    z = jnp.dot(z.astype(cdt), w2o_ref[...],
                preferred_element_type=jnp.float32) + b2o_ref[...]
    # downstream head fused here
    out_ref[...] = (jnp.dot(z.astype(cdt), wd_ref[...],
                            preferred_element_type=jnp.float32)
                    + bd_ref[...]).astype(out_ref.dtype)


def _choose_sets_per_tile(bm, n, target_rows, align):
    """~target_rows rows per x tile, sublane-aligned.  The wrapper zero-pads
    B*M up to a multiple of the returned value, so no divisor search is needed
    (no whole-problem fallback)."""
    t = max(1, target_rows // max(n, 1))
    t = max(align, (t // align) * align)
    return min(t, _ceil_to(bm, align))


def dssn_forward(x, params, *, sets_per_tile=None, compute_dtype=jnp.bfloat16):
    """x: (B, M, N, D) float32.  Returns (B, C) float32.

    compute_dtype: dtype of the MXU operands and the s_pre intermediate.
    bf16 (default) halves phase-1 HBM traffic; accumulation, bias/ReLU/mean,
    BatchNorm statistics and the output stay float32.  Pass jnp.float32 for
    tight numerical parity with the reference.
    """
    B, M, N, D = x.shape
    (w1i, b1i, w2i, b2i, gamma, beta, w1o, b1o, w2o, b2o, wd, bd) = params
    H1 = w1i.shape[1]
    H2 = w1o.shape[1]
    C = wd.shape[1]
    BM = B * M
    cdt = jnp.dtype(compute_dtype)
    isz = cdt.itemsize
    align = 8 * max(1, 4 // isz)          # sublane alignment for packed dtypes

    # Zero-pad the inner hidden (lane) dim to a multiple of 128 so the phase-1
    # output store is lane-dense (unmasked vst).  Padded columns stay exactly 0
    # through relu/mean and are killed by the zero rows of w2i_p, so phase 2
    # (and the BN statistics) remain exact.
    H1p = _ceil_to(H1, 128)
    w1i_p = jnp.zeros((D, H1p), jnp.float32).at[:, :H1].set(w1i).astype(cdt)
    b1i_p = jnp.zeros((1, H1p), jnp.float32).at[:, :H1].set(b1i)        # f32
    w2i_p = jnp.zeros((H1p, H1), jnp.float32).at[:H1, :].set(w2i).astype(cdt)
    w1o_c = w1o.astype(cdt)
    w2o_c = w2o.astype(cdt)
    wd_c = wd.astype(cdt)

    vmem_cap = _vmem_capacity_bytes()
    if sets_per_tile is None:
        # bigger tiles on 128 MiB parts (v5e/v6e), tighter on v7x's 64 MiB
        target_rows = 2048 if vmem_cap >= (96 << 20) else 1024
        sets_per_tile = _choose_sets_per_tile(BM, N, target_rows, align)
    sets_per_tile = _ceil_to(max(int(sets_per_tile), 1), align)

    num_tiles = pl.cdiv(BM, sets_per_tile)
    BM_pad = num_tiles * sets_per_tile
    tile_rows = sets_per_tile * N

    # x as a row-major (rows, D) slab in the MXU operand dtype; zero-pad the
    # ragged tail (padded s_pre rows are sliced off before phase 2, so the BN
    # statistics never see them).
    x2d = x.reshape(BM * N, D).astype(cdt)
    if BM_pad != BM:
        x2d = jnp.pad(x2d, ((0, (BM_pad - BM) * N), (0, 0)))

    # Lane-padding-aware VMEM budget (a (rows, D=16) tile occupies 128 lanes in
    # VMEM regardless of D).  Capped at 3/4 of the physical per-core VMEM.
    est = (3 * _vmem_bytes(tile_rows, D, isz)            # x tile, Buffered(3)
           + _vmem_bytes(D, H1p, isz)                    # w1
           + _vmem_bytes(1, H1p, 4)                      # b1
           + _vmem_bytes(tile_rows, H1p, 4)              # h intermediate (f32)
           + 2 * _vmem_bytes(sets_per_tile, H1p, isz))   # s_pre out, dbl-buffered
    vmem_limit = int(min(max(2 * est + (8 << 20), 32 << 20), (vmem_cap * 3) // 4))

    # ---- phase 1: tiled + pipelined over the B*M row-of-sets axis ------------
    w_spec = pl.BlockSpec((D, H1p), lambda i: (0, 0))
    b_spec = pl.BlockSpec((1, H1p), lambda i: (0, 0))

    def run_phase1(pm):
        if pm is None:
            x_spec = pl.BlockSpec((tile_rows, D), lambda i: (i, 0))
        else:
            x_spec = pl.BlockSpec((tile_rows, D), lambda i: (i, 0),
                                  pipeline_mode=pm)
        return pl.pallas_call(
            _inner_kernel,
            out_shape=jax.ShapeDtypeStruct((BM_pad, H1p), cdt),
            grid=(num_tiles,),
            in_specs=[x_spec, w_spec, b_spec],
            out_specs=pl.BlockSpec((sets_per_tile, H1p), lambda i: (i, 0)),
            compiler_params=pltpu.CompilerParams(
                dimension_semantics=("parallel",),
                vmem_limit_bytes=vmem_limit),
        )(x2d, w1i_p, b1i_p)

    if _BUFFERED3 is not None:
        try:
            s_pre = run_phase1(_BUFFERED3)
        except Exception:
            s_pre = run_phase1(None)
    else:
        s_pre = run_phase1(None)

    if BM_pad != BM:
        s_pre = s_pre[:BM]

    # ---- phase 2: whole (B*M, H) problem is tiny; single grid step -----------
    p2_bytes = (_vmem_bytes(BM, H1p, isz) + _vmem_bytes(H1p, H1, isz)
                + _vmem_bytes(1, H1, 4) + _vmem_bytes(BM, H1, 4)
                + _vmem_bytes(H1, H2, isz) + _vmem_bytes(1, H2, 4)
                + _vmem_bytes(BM, H2, 4) + _vmem_bytes(H2, H2, isz)
                + _vmem_bytes(B, H2, 4) + _vmem_bytes(H2, C, isz)
                + _vmem_bytes(1, C, 4) + _vmem_bytes(B, C, 4))
    # TODO(synk): tile phase 2 over B*M (two-pass BN statistics) if this trips.
    assert p2_bytes <= (vmem_cap * 3) // 4, (
        f"phase-2 resident footprint {p2_bytes} B exceeds the VMEM budget")

    def full_spec(a):
        nd = a.ndim
        return pl.BlockSpec(a.shape, lambda i, _nd=nd: (0,) * _nd)

    smem_spec = pl.BlockSpec(memory_space=pltpu.MemorySpace.SMEM)

    out = pl.pallas_call(
        functools.partial(_outer_kernel, outer_m=M),
        out_shape=jax.ShapeDtypeStruct((B, C), jnp.float32),
        grid=(1,),
        in_specs=[full_spec(s_pre), full_spec(w2i_p), full_spec(b2i),
                  smem_spec, smem_spec,
                  full_spec(w1o_c), full_spec(b1o),
                  full_spec(w2o_c), full_spec(b2o),
                  full_spec(wd_c), full_spec(bd)],
        out_specs=pl.BlockSpec((B, C), lambda i: (0, 0)),
        compiler_params=pltpu.CompilerParams(
            dimension_semantics=("arbitrary",)),
    )(s_pre, w2i_p, b2i, gamma, beta, w1o_c, b1o, w2o_c, b2o, wd_c, bd)
    return out


def dssn_reference(x, params):
    """Pure-JAX reference mirroring the PyTorch forward (training-mode BN)."""
    (w1i, b1i, w2i, b2i, gamma, beta, w1o, b1o, w2o, b2o, wd, bd) = params
    h = jnp.maximum(x @ w1i + b1i, 0.0) @ w2i + b2i          # inner_transform
    s = jnp.mean(h, axis=-2)                                 # mean over inner set
    mu = jnp.mean(s)
    var = jnp.mean((s - mu) ** 2)
    s = (s - mu) / jnp.sqrt(var + 1e-5) * gamma[0, 0] + beta[0, 0]
    g = jnp.maximum(s @ w1o + b1o, 0.0) @ w2o + b2o          # outer_transform
    z = jnp.mean(g, axis=-2)                                 # mean over outer set
    return z @ wd + bd                                       # downstream_network


def init_params(key, D, H1, H2, C):
    ks = jax.random.split(key, 6)
    scale = 0.1
    w1i = scale * jax.random.normal(ks[0], (D, H1), jnp.float32)
    b1i = jnp.zeros((1, H1), jnp.float32)
    w2i = scale * jax.random.normal(ks[1], (H1, H1), jnp.float32)
    b2i = 0.01 * jnp.ones((1, H1), jnp.float32)
    gamma = jnp.ones((1, 1), jnp.float32)     # BatchNorm2d(1) weight
    beta = jnp.zeros((1, 1), jnp.float32)     # BatchNorm2d(1) bias
    w1o = scale * jax.random.normal(ks[2], (H1, H2), jnp.float32)
    b1o = jnp.zeros((1, H2), jnp.float32)
    w2o = scale * jax.random.normal(ks[3], (H2, H2), jnp.float32)
    b2o = 0.01 * jnp.ones((1, H2), jnp.float32)
    wd = scale * jax.random.normal(ks[4], (H2, C), jnp.float32)
    bd = jnp.zeros((1, C), jnp.float32)
    return (w1i, b1i, w2i, b2i, gamma, beta, w1o, b1o, w2o, b2o, wd, bd)


if __name__ == "__main__":
    B, M, N, D = 2, 16, 8, 16  # batch, outer-set size, inner-set size, features
    H1, H2, C = 32, 32, 8      # inner hidden, outer hidden, downstream classes

    key = jax.random.PRNGKey(0)
    kx, kp = jax.random.split(key)
    x = jax.random.normal(kx, (B, M, N, D), jnp.float32)
    params = init_params(kp, D, H1, H2, C)

    ref = dssn_reference(x, params)

    # sets_per_tile=16 -> grid=(2,): exercises the pipelined multi-tile path and
    # keeps the bf16 s_pre output blocks packed-sublane aligned (16, 128).
    # f32 path: tight numerical parity with the reference.
    out_f32 = jax.block_until_ready(
        dssn_forward(x, params, sets_per_tile=16, compute_dtype=jnp.float32))
    assert out_f32.shape == (B, C)
    assert jnp.allclose(out_f32, ref, rtol=5e-4, atol=5e-4), (out_f32, ref)

    # default bf16 path: halves phase-1 HBM traffic; f32 accumulation keeps the
    # drift small, so a loose tolerance still catches structural errors.
    out_bf16 = jax.block_until_ready(
        dssn_forward(x, params, sets_per_tile=16))
    assert out_bf16.shape == (B, C)
    assert jnp.allclose(out_bf16, ref, rtol=5e-2, atol=5e-2), (out_bf16, ref)

    print("KERNEL_OK")
</pallas_src>

<mosaic_0001>
module attributes {stable_mosaic.version = 11 : i64} {
  func.func @_inner_kernel(%arg0: i32, %arg1: memref<128x16xf32, #tpu.memory_space<vmem>>, %arg2: memref<16x128xf32, #tpu.memory_space<vmem>>, %arg3: memref<1x128xf32, #tpu.memory_space<vmem>>, %arg4: memref<16x128xf32, #tpu.memory_space<vmem>>) attributes {dimension_semantics = [#tpu.dimension_semantics<parallel>], iteration_bounds = array<i64: 2>, scalar_prefetch = 0 : i64, scratch_operands = 0 : i64, tpu.core_type = #tpu.core_type<tc>, window_params = [{transform_indices = @transform_0, window_bounds = array<i64: 128, 16>}, {pipeline_mode = #tpu.pipeline_mode<synchronous>, transform_indices = @transform_1, window_bounds = array<i64: 16, 128>}, {pipeline_mode = #tpu.pipeline_mode<synchronous>, transform_indices = @transform_2, window_bounds = array<i64: 1, 128>}, {transform_indices = @transform_3, window_bounds = array<i64: 16, 128>}]} {
    %c0 = arith.constant 0 : index
    %c0_0 = arith.constant 0 : index
    %0 = vector.load %arg1[%c0, %c0_0] : memref<128x16xf32, #tpu.memory_space<vmem>>, vector<128x16xf32>
    %c0_1 = arith.constant 0 : index
    %c0_2 = arith.constant 0 : index
    %1 = vector.load %arg2[%c0_1, %c0_2] : memref<16x128xf32, #tpu.memory_space<vmem>>, vector<16x128xf32>
    %cst = arith.constant dense<0.000000e+00> : vector<128x128xf32>
    %2 = tpu.matmul %0, %1, %cst {dimension_numbers = #tpu.dot_dimension_numbers<[1], [0], [0], [1], [0, 0, 1, 1], [], []>} : vector<128x16xf32>, vector<16x128xf32>, vector<128x128xf32> -> vector<128x128xf32>
    %c0_3 = arith.constant 0 : index
    %c0_4 = arith.constant 0 : index
    %3 = vector.load %arg3[%c0_3, %c0_4] : memref<1x128xf32, #tpu.memory_space<vmem>>, vector<1x128xf32>
    %4 = vector.broadcast %3 : vector<1x128xf32> to vector<128x128xf32>
    %5 = arith.addf %2, %4 : vector<128x128xf32>
    %cst_5 = arith.constant 0.000000e+00 : f32
    %6 = vector.broadcast %cst_5 : f32 to vector<128x128xf32>
    %7 = arith.maximumf %5, %6 : vector<128x128xf32>
    %8 = vector.shape_cast %7 : vector<128x128xf32> to vector<16x8x128xf32>
    %cst_6 = arith.constant dense<0.000000e+00> : vector<16x128xf32>
    %9 = vector.multi_reduction <add>, %8, %cst_6 [1] : vector<16x8x128xf32> to vector<16x128xf32>
    %cst_7 = arith.constant 8.000000e+00 : f32
    %10 = vector.broadcast %cst_7 : f32 to vector<16x128xf32>
    %11 = arith.divf %9, %10 : vector<16x128xf32>
    %c0_8 = arith.constant 0 : index
    %c0_9 = arith.constant 0 : index
    %12 = vector.load %arg4[%c0_8, %c0_9] : memref<16x128xf32, #tpu.memory_space<vmem>>, vector<16x128xf32>
    tpu.vector_store %arg4[%c0_8, %c0_9], %11 {strides = array<i32>} : memref<16x128xf32, #tpu.memory_space<vmem>>, vector<16x128xf32>,
    return
  }
  func.func @transform_0(%arg0: i32) -> (i32, i32) {
    %c0_i32 = arith.constant 0 : i32
    %c0_i32_0 = arith.constant 0 : i32
    return %arg0, %c0_i32 : i32, i32
  }
  func.func @transform_1(%arg0: i32) -> (i32, i32) {
    %c0_i32 = arith.constant 0 : i32
    %c0_i32_0 = arith.constant 0 : i32
    %c0_i32_1 = arith.constant 0 : i32
    return %c0_i32, %c0_i32_0 : i32, i32
  }
  func.func @transform_2(%arg0: i32) -> (i32, i32) {
    %c0_i32 = arith.constant 0 : i32
    %c0_i32_0 = arith.constant 0 : i32
    %c0_i32_1 = arith.constant 0 : i32
    return %c0_i32, %c0_i32_0 : i32, i32
  }
  func.func @transform_3(%arg0: i32) -> (i32, i32) {
    %c0_i32 = arith.constant 0 : i32
    %c0_i32_0 = arith.constant 0 : i32
    return %arg0, %c0_i32 : i32, i32
  }
}

</mosaic_0001>

<llo_original>
// kernel: tpu_custom_call.1
$region0: #{tpu_custom_call.1}
  #allocation0 [shape = 'u32[]', space=smem, size = 0x4, offset = 0x4, fixed_abs, tag = 'smem constant byte address 0x4 - core index']
  #allocation1 [shape = 'u32[144,128]{1,0:T(1,128)}', space=vmem, size = 0x12000, scoped, tag = 'internal scratch']
  %s0 = inlined_call_operand.vmem [shape: f32[256,16], index: 0, kind: input, shape index: {}]
  %s1 = inlined_call_operand.vmem [shape: f32[16,128], index: 1, kind: input, shape index: {}]
  %s2 = inlined_call_operand.vmem [shape: f32[1,128], index: 2, kind: input, shape index: {}]
  %s3 = inlined_call_operand.hbm [shape: f32[32,128], index: 3, kind: output, shape index: {}]
  %s4 = sld [smem:[#allocation0]]
  $region45: #{tpu_custom_call.1} parent=0
    _
  %s6 = ssub.s32 1, %s4
  %s7 = scalar_select 0, %s6, %s4
  $region1: #{tpu_custom_call.1} parent=0
    #allocation2 [shape = 'u8[16384]{0}', space=vmem, size = 0x4000, scoped, tag = 'output window, operand 0']
    #allocation3 [shape = 's32[2]{0}', space=sflag, size = 0x8, scoped, tag = 'scoped memory for tpu_custom_call.1']
    %8 = vsyncpa [#allocation3], 0
    %s9 = scalar_lea.sflag [#allocation3], 1
    %10 = vsyncpa %s9, 0
    loop: start=0, step=1, limit=4
    $region2: #{tpu_custom_call.1} parent=1 // loop_pre_header
      _
    $region3: #{tpu_custom_call.1} parent=1 // loop_header
      %s12 = sphi 0, %s16
      %p13 = scmp.ge.s32.totalorder %s12, 4
      %s22 = sphi 0, %s24
      %s25 = sphi 0, %s22
      %s26 = sphi 0, %s25
      %s42 = sphi 0, %s26
      %s46 = sphi 0, %s46
      %s48 = sphi 0, %s46
      %s49 = sphi 0, %s48
      %s63 = sphi 0, %s49
      %s67 = sphi 0, %s67
      %s69 = sphi 0, %s67
      %s70 = sphi 0, %s69
      %s84 = sphi 0, %s70
      %s90 = sphi 0, %s92
      %s93 = sphi 0, %s90
      %s94 = sphi 0, %s93
      %s110 = sphi 0, %s94
    $region4: #{tpu_custom_call.1} parent=1 // loop_header_branch
      %15 = sbr.rel (%p13) target = $region8
    $region5: #{tpu_custom_call.1} parent=1 // loop_body
      %s17 = ssub.s32 %s12, 1
      %s18 = ssub.s32 %s12, 2
      %s19 = sadd.s32 %s12, 1
      %s20 = ssub.s32 %s12, %s19
      %p21 = scmp.eq.s32.totalorder %s20, 0
      %s23 = sadd.s32 %s22, 1
      %s24 = scalar_select %p21, %s22, %s23
      %p27 = pneg %p21
      %p28 = scmp.eq.s32.totalorder %s12, 1
      %p29 = por %p27, %p28
      %p30 = scmp.ne.s32.totalorder %s22, %s25
      %p31 = scmp.eq.s32.totalorder %s12, 0
      %p32 = por %p30, %p31
      %p33 = scmp.ne.s32.totalorder %s22, %s25
      %p34 = scmp.eq.s32.totalorder %s17, 1
      %p35 = por %p33, %p34
      %p36 = scmp.ne.s32.totalorder %s25, %s26
      %p37 = scmp.eq.s32.totalorder %s17, 0
      %p38 = por %p36, %p37
      %p39 = scmp.ne.s32.totalorder %s25, %s26
      %p40 = scmp.eq.s32.totalorder %s18, 1
      %p41 = por %p39, %p40
      %p43 = scmp.ne.s32.totalorder %s26, %s42
      %p44 = scmp.eq.s32.totalorder %s18, 0
      %p45 = por %p43, %p44
      %s47 = sadd.s32 %s46, 1
      %p50 = scmp.eq.s32.totalorder %s12, 1
      %p51 = scmp.ne.s32.totalorder %s46, %s48
      %p52 = scmp.eq.s32.totalorder %s12, 0
      %p53 = por %p51, %p52
      %p54 = scmp.ne.s32.totalorder %s46, %s48
      %p55 = scmp.eq.s32.totalorder %s17, 1
      %p56 = por %p54, %p55
      %p57 = scmp.ne.s32.totalorder %s48, %s49
      %p58 = scmp.eq.s32.totalorder %s17, 0
      %p59 = por %p57, %p58
      %p60 = scmp.ne.s32.totalorder %s48, %s49
      %p61 = scmp.eq.s32.totalorder %s18, 1
      %p62 = por %p60, %p61
      %p64 = scmp.ne.s32.totalorder %s49, %s63
      %p65 = scmp.eq.s32.totalorder %s18, 0
      %p66 = por %p64, %p65
      %s68 = sadd.s32 %s67, 1
      %p71 = scmp.eq.s32.totalorder %s12, 1
      %p72 = scmp.ne.s32.totalorder %s67, %s69
      %p73 = scmp.eq.s32.totalorder %s12, 0
      %p74 = por %p72, %p73
      %p75 = scmp.ne.s32.totalorder %s67, %s69
      %p76 = scmp.eq.s32.totalorder %s17, 1
      %p77 = por %p75, %p76
      %p78 = scmp.ne.s32.totalorder %s69, %s70
      %p79 = scmp.eq.s32.totalorder %s17, 0
      %p80 = por %p78, %p79
      %p81 = scmp.ne.s32.totalorder %s69, %s70
      %p82 = scmp.eq.s32.totalorder %s18, 1
      %p83 = por %p81, %p82
      %p85 = scmp.ne.s32.totalorder %s70, %s84
      %p86 = scmp.eq.s32.totalorder %s18, 0
      %p87 = por %p85, %p86
      %s88 = ssub.s32 %s12, %s19
      %p89 = scmp.eq.s32.totalorder %s88, 0
      %s91 = sadd.s32 %s90, 1
      %s92 = scalar_select %p89, %s90, %s91
      %p95 = pneg %p89
      %p96 = scmp.eq.s32.totalorder %s12, 1
      %p97 = por %p95, %p96
      %p98 = scmp.ne.s32.totalorder %s90, %s93
      %p99 = scmp.eq.s32.totalorder %s12, 0
      %p100 = por %p98, %p99
      %p101 = scmp.ne.s32.totalorder %s90, %s93
      %p102 = scmp.eq.s32.totalorder %s17, 1
      %p103 = por %p101, %p102
      %p104 = scmp.ne.s32.totalorder %s93, %s94
      %p105 = scmp.eq.s32.totalorder %s17, 0
      %p106 = por %p104, %p105
      %p107 = scmp.ne.s32.totalorder %s93, %s94
      %p108 = scmp.eq.s32.totalorder %s18, 1
      %p109 = por %p107, %p108
      %p111 = scmp.ne.s32.totalorder %s94, %s110
      %p112 = scmp.eq.s32.totalorder %s18, 0
      %p113 = por %p111, %p112
      %p114 = scmp.le.s32.totalorder 1, %s12
      %p115 = scmp.lt.s32.totalorder %s12, 3
      %p116 = pnand %p114, %p115
      %p117 = pneg %p116
      // Predicated region
      $region9: #{tpu_custom_call.1} parent=5 // pred_check
        _
      $region10: #{tpu_custom_call.1} parent=5 // pred_check_branch
        %119 = sbr.rel (%p116) target = $region12
      $region11: #{tpu_custom_call.1} parent=5 // pred_region
        %s120 = ssub.s32 %s12, 1
        // Predicated region
        $region13: #{tpu_custom_call.1} parent=11 // pred_check
          %p121 = pneg %p59
        $region14: #{tpu_custom_call.1} parent=11 // pred_check_branch
          %123 = sbr.rel (%p121) target = $region16
        $region15: #{tpu_custom_call.1} parent=11 // pred_region
          _
        $region16: #{tpu_custom_call.1} parent=11 // pred_fallthru
          _
        // Predicated region
        $region17: #{tpu_custom_call.1} parent=11 // pred_check
          %p124 = pneg %p80
        $region18: #{tpu_custom_call.1} parent=11 // pred_check_branch
          %126 = sbr.rel (%p124) target = $region20
        $region19: #{tpu_custom_call.1} parent=11 // pred_region
          _
        $region20: #{tpu_custom_call.1} parent=11 // pred_fallthru
          _
      $region12: #{tpu_custom_call.1} parent=5 // pred_fallthru
        _
      %p127 = scmp.lt.s32.totalorder %s12, 2
      // Predicated region
      $region21: #{tpu_custom_call.1} parent=5 // pred_check
        %p128 = pneg %p127
      $region22: #{tpu_custom_call.1} parent=5 // pred_check_branch
        %130 = sbr.rel (%p128) target = $region24
      $region23: #{tpu_custom_call.1} parent=5 // pred_region
        // Predicated region
        $region25: #{tpu_custom_call.1} parent=23 // pred_check
          %p131 = pneg %p32
        $region26: #{tpu_custom_call.1} parent=23 // pred_check_branch
          %133 = sbr.rel (%p131) target = $region28
        $region27: #{tpu_custom_call.1} parent=23 // pred_region
          %s134 = smul.u32 16, %s12
          %p135 = scmp.lt.s32.totalorder %s134, 31
          %s136 = scalar_select %p135, %s134, 31
          %s137 = smul.addr %s136, 8
          %s138 = scalar_lea.vmem %s0, %s137
          %s139 = smul.u32 16, %s12
        $region28: #{tpu_custom_call.1} parent=23 // pred_fallthru
          _
      $region24: #{tpu_custom_call.1} parent=5 // pred_fallthru
        _
      %p140 = scmp.le.s32.totalorder 1, %s12
      %p141 = scmp.lt.s32.totalorder %s12, 3
      %p142 = pnand %p140, %p141
      %p143 = pneg %p142
      // Predicated region
      $region29: #{tpu_custom_call.1} parent=5 // pred_check
        _
      $region30: #{tpu_custom_call.1} parent=5 // pred_check_branch
        %145 = sbr.rel (%p142) target = $region32
      $region31: #{tpu_custom_call.1} parent=5 // pred_region
        %s146 = ssub.s32 %s12, 1
        %s147 = smul.u32 16, %s17
        %p148 = scmp.lt.s32.totalorder %s147, 31
        %s149 = scalar_select %p148, %s147, 31
        %s150 = smul.addr %s149, 8
        %s151 = scalar_lea.vmem %s0, %s150
        %p152 = pneg %p38
        %p153 = pneg %p35
        %p154 = pneg %p59
        %p155 = pneg %p56
        %p156 = pneg %p80
        %p157 = pneg %p77
        %p158 = pneg %p106
        %p159 = pneg %p103
        %s160 = sand.u32 %s93, 1
        %s161 = scalar_lea.sflag [#allocation3], %s160
        %s162 = sand.u32 %s93, 1
        %s163 = smul.addr %s162, 16
        %s164 = scalar_lea.vmem [#allocation2], %s163
        %s165 = smul.u32 16, %s17
        %p166 = scmp.lt.s32.totalorder %s165, 31
        %s167 = scalar_select %p166, %s165, 31
        %s168 = smul.addr %s167, 8
        %s169 = scalar_lea.vmem %s0, %s168
        %s170 = smul.u32 16, %s17
        %s171 = smul.u32 2, %s17
        %v172 = vld [vmem:[%s169] sm:$0xff]
        %v173 = vld [vmem:[%s169 + $0x8] sm:$0xff]
        %v174 = vld [vmem:[%s169 + $0x10] sm:$0xff]
        %v175 = vld [vmem:[%s169 + $0x18] sm:$0xff]
        %v176 = vld [vmem:[%s169 + $0x20] sm:$0xff]
        %v177 = vld [vmem:[%s169 + $0x28] sm:$0xff]
        %v178 = vld [vmem:[%s169 + $0x30] sm:$0xff]
        %v179 = vld [vmem:[%s169 + $0x38] sm:$0xff]
        %v180 = vld [vmem:[%s169 + $0x40] sm:$0xff]
        %v181 = vld [vmem:[%s169 + $0x48] sm:$0xff]
        %v182 = vld [vmem:[%s169 + $0x50] sm:$0xff]
        %v183 = vld [vmem:[%s169 + $0x58] sm:$0xff]
        %v184 = vld [vmem:[%s169 + $0x60] sm:$0xff]
        %v185 = vld [vmem:[%s169 + $0x68] sm:$0xff]
        %v186 = vld [vmem:[%s169 + $0x70] sm:$0xff]
        %v187 = vld [vmem:[%s169 + $0x78] sm:$0xff]
        %v188 = vld [vmem:[%s1] sm:$0xff]
        %v189 = vld [vmem:[%s1 + $0x8] sm:$0xff]
        %v190 = vld [vmem:[%s2] sm:$0x1]
        %v192 = vlaneseq
        %v193 = vshrl.u32 %v192, 7
        %v194 = vsub.s32 0, %v193
        %v195 = vrot.slane %v190, %v194
        %vm197 = vcmask 130048
        %v199 = vsel %vm197, %v172, 0
        %v202 = vsel %vm197, %v173, 0
        %v205 = vsel %vm197, %v174, 0
        %v208 = vsel %vm197, %v175, 0
        %v211 = vsel %vm197, %v176, 0
        %v214 = vsel %vm197, %v177, 0
        %v217 = vsel %vm197, %v178, 0
        %v220 = vsel %vm197, %v179, 0
        %v223 = vsel %vm197, %v180, 0
        %v226 = vsel %vm197, %v181, 0
        %v229 = vsel %vm197, %v182, 0
        %v232 = vsel %vm197, %v183, 0
        %v235 = vsel %vm197, %v184, 0
        %v238 = vsel %vm197, %v185, 0
        %v241 = vsel %vm197, %v186, 0
        %v244 = vsel %vm197, %v187, 0
        %246 = vmatprep.subr.mxu0 0.0
        %247 = vmatpush1.msra.mxu0 %v188
        %248 = vmatprep.subr.mxu0 0.0
        %249 = vmatpush1.msra.mxu0 %v189
        %250 = vmatprep.subr.mxu0 0.0
        %251 = vmatpush1.msra.mxu0 0.0
        %252 = vmatprep.subr.mxu0 0.0
        %253 = vmatpush1.msra.mxu0 0.0
        %254 = vmatprep.subr.mxu0 0.0
        %255 = vmatpush1.msra.mxu0 0.0
        %256 = vmatprep.subr.mxu0 0.0
        %257 = vmatpush1.msra.mxu0 0.0
        %258 = vmatprep.subr.mxu0 0.0
        %259 = vmatpush1.msra.mxu0 0.0
        %260 = vmatprep.subr.mxu0 0.0
        %261 = vmatpush1.msra.mxu0 0.0
        %262 = vmatprep.subr.mxu0 0.0
        %263 = vmatpush1.msra.mxu0 0.0
        %264 = vmatprep.subr.mxu0 0.0
        %265 = vmatpush1.msra.mxu0 0.0
        %266 = vmatprep.subr.mxu0 0.0
        %267 = vmatpush1.msra.mxu0 0.0
        %268 = vmatprep.subr.mxu0 0.0
        %269 = vmatpush1.msra.mxu0 0.0
        %270 = vmatprep.subr.mxu0 0.0
        %271 = vmatpush1.msra.mxu0 0.0
        %272 = vmatprep.subr.mxu0 0.0
        %273 = vmatpush1.msra.mxu0 0.0
        %274 = vmatprep.subr.mxu0 0.0
        %275 = vmatpush1.msra.mxu0 0.0
        %276 = vmatprep.subr.mxu0 0.0
        %277 = vmatpush1.msra.mxu0 0.0
        %278 = vmatprep.subr.mxu0 0.0
        %279 = vmatpush1.msra.mxu0 0.0
        %280 = vmatprep.subr.mxu0 0.0
        %281 = vmatpush1.msra.mxu0 0.0
        %282 = vmatprep.subr.mxu0 0.0
        %283 = vmatpush1.msra.mxu0 0.0
        %284 = vmatprep.subr.mxu0 0.0
        %285 = vmatpush1.msra.mxu0 0.0
        %286 = vmatprep.subr.mxu0 0.0
        %287 = vmatpush1.msra.mxu0 0.0
        %288 = vmatprep.subr.mxu0 0.0
        %289 = vmatpush1.msra.mxu0 0.0
        %290 = vmatprep.subr.mxu0 0.0
        %291 = vmatpush1.msra.mxu0 0.0
        %292 = vmatprep.subr.mxu0 0.0
        %293 = vmatpush1.msra.mxu0 0.0
        %294 = vmatprep.subr.mxu0 0.0
        %295 = vmatpush1.msra.mxu0 0.0
        %296 = vmatprep.subr.mxu0 0.0
        %297 = vmatpush1.msra.mxu0 0.0
        %298 = vmatprep.subr.mxu0 0.0
        %299 = vmatpush1.msra.mxu0 0.0
        %300 = vmatprep.subr.mxu0 0.0
        %301 = vmatpush1.msra.mxu0 0.0
        %302 = vmatprep.subr.mxu0 0.0
        %303 = vmatpush1.msra.mxu0 0.0
        %304 = vmatprep.subr.mxu0 0.0
        %305 = vmatpush1.msra.mxu0 0.0
        %306 = vmatprep.subr.mxu0 0.0
        %307 = vmatpush1.msra.mxu0 0.0
        %308 = vmatprep.subr.mxu0 0.0
        %309 = vmatpush1.msra.mxu0 0.0
        %310 = vmatprep.mubr.f32.mxu0 0.0
        %311 = vmatmul.mubr.f32.gmra.mrb[0].mxu0 %v199
        %v312 = vpop.f32.mrb[0].mxu0
        %v313 = vadd.f32 %v195, %v312
        %v314 = vpop.f32.mrb[0].mxu0
        %315 = vmatprep.mubr.f32.mxu0 0.0
        %316 = vmatmul.mubr.f32.gmra.mrb[0].mxu0 %v202
        %v317 = vpop.f32.mrb[0].mxu0
        %v318 = vadd.f32 %v195, %v317
        %v319 = vpop.f32.mrb[0].mxu0
        %320 = vmatprep.mubr.f32.mxu0 0.0
        %321 = vmatmul.mubr.f32.gmra.mrb[0].mxu0 %v205
        %v322 = vpop.f32.mrb[0].mxu0
        %v323 = vadd.f32 %v195, %v322
        %v324 = vpop.f32.mrb[0].mxu0
        %325 = vmatprep.mubr.f32.mxu0 0.0
        %326 = vmatmul.mubr.f32.gmra.mrb[0].mxu0 %v208
        %v327 = vpop.f32.mrb[0].mxu0
        %v328 = vadd.f32 %v195, %v327
        %v329 = vpop.f32.mrb[0].mxu0
        %330 = vmatprep.mubr.f32.mxu0 0.0
        %331 = vmatmul.mubr.f32.gmra.mrb[0].mxu0 %v211
        %v332 = vpop.f32.mrb[0].mxu0
        %v333 = vadd.f32 %v195, %v332
        %v334 = vpop.f32.mrb[0].mxu0
        %335 = vmatprep.mubr.f32.mxu0 0.0
        %336 = vmatmul.mubr.f32.gmra.mrb[0].mxu0 %v214
        %v337 = vpop.f32.mrb[0].mxu0
        %v338 = vadd.f32 %v195, %v337
        %v339 = vpop.f32.mrb[0].mxu0
        %340 = vmatprep.mubr.f32.mxu0 0.0
        %341 = vmatmul.mubr.f32.gmra.mrb[0].mxu0 %v217
        %v342 = vpop.f32.mrb[0].mxu0
        %v343 = vadd.f32 %v195, %v342
        %v344 = vpop.f32.mrb[0].mxu0
        %345 = vmatprep.mubr.f32.mxu0 0.0
        %346 = vmatmul.mubr.f32.gmra.mrb[0].mxu0 %v220
        %v347 = vpop.f32.mrb[0].mxu0
        %v348 = vadd.f32 %v195, %v347
        %v349 = vpop.f32.mrb[0].mxu0
        %350 = vmatprep.mubr.f32.mxu0 0.0
        %351 = vmatmul.mubr.f32.gmra.mrb[0].mxu0 %v223
        %v352 = vpop.f32.mrb[0].mxu0
        %v353 = vadd.f32 %v195, %v352
        %v354 = vpop.f32.mrb[0].mxu0
        %355 = vmatprep.mubr.f32.mxu0 0.0
        %356 = vmatmul.mubr.f32.gmra.mrb[0].mxu0 %v226
        %v357 = vpop.f32.mrb[0].mxu0
        %v358 = vadd.f32 %v195, %v357
        %v359 = vpop.f32.mrb[0].mxu0
        %360 = vmatprep.mubr.f32.mxu0 0.0
        %361 = vmatmul.mubr.f32.gmra.mrb[0].mxu0 %v229
        %v362 = vpop.f32.mrb[0].mxu0
        %v363 = vadd.f32 %v195, %v362
        %v364 = vpop.f32.mrb[0].mxu0
        %365 = vmatprep.mubr.f32.mxu0 0.0
        %366 = vmatmul.mubr.f32.gmra.mrb[0].mxu0 %v232
        %v367 = vpop.f32.mrb[0].mxu0
        %v368 = vadd.f32 %v195, %v367
        %v369 = vpop.f32.mrb[0].mxu0
        %370 = vmatprep.mubr.f32.mxu0 0.0
        %371 = vmatmul.mubr.f32.gmra.mrb[0].mxu0 %v235
        %v372 = vpop.f32.mrb[0].mxu0
        %v373 = vadd.f32 %v195, %v372
        %v374 = vpop.f32.mrb[0].mxu0
        %375 = vmatprep.mubr.f32.mxu0 0.0
        %376 = vmatmul.mubr.f32.gmra.mrb[0].mxu0 %v238
        %v377 = vpop.f32.mrb[0].mxu0
        %v378 = vadd.f32 %v195, %v377
        %v379 = vpop.f32.mrb[0].mxu0
        %380 = vmatprep.mubr.f32.mxu0 0.0
        %381 = vmatmul.mubr.f32.gmra.mrb[0].mxu0 %v241
        %v382 = vpop.f32.mrb[0].mxu0
        %v383 = vadd.f32 %v195, %v382
        %v384 = vpop.f32.mrb[0].mxu0
        %385 = vmatprep.mubr.f32.mxu0 0.0
        %386 = vmatmul.mubr.f32.gmra.mrb[0].mxu0 %v244
        %v387 = vpop.f32.mrb[0].mxu0
        %v388 = vadd.f32 %v195, %v387
        %v389 = vpop.f32.mrb[0].mxu0
        %390 = vdwg.mxu0
        %v391 = vmax.f32 %v313, 0.0
        %v392 = vmax.f32 %v318, 0.0
        %v393 = vmax.f32 %v323, 0.0
        %v394 = vmax.f32 %v328, 0.0
        %v395 = vmax.f32 %v333, 0.0
        %v396 = vmax.f32 %v338, 0.0
        %v397 = vmax.f32 %v343, 0.0
        %v398 = vmax.f32 %v348, 0.0
        %v399 = vmax.f32 %v353, 0.0
        %v400 = vmax.f32 %v358, 0.0
        %v401 = vmax.f32 %v363, 0.0
        %v402 = vmax.f32 %v368, 0.0
        %v403 = vmax.f32 %v373, 0.0
        %v404 = vmax.f32 %v378, 0.0
        %v405 = vmax.f32 %v383, 0.0
        %v406 = vmax.f32 %v388, 0.0
        %v407 = vrot.slane %v391, 4
        %v408 = vadd.f32 %v391, %v407
        %v409 = vrot.slane %v408, 2
        %v410 = vadd.f32 %v408, %v409
        %v411 = vrot.slane %v410, 1
        %v412 = vadd.f32 %v410, %v411
        %v413 = vrot.slane %v392, 4
        %v414 = vadd.f32 %v392, %v413
        %v415 = vrot.slane %v414, 2
        %v416 = vadd.f32 %v414, %v415
        %v417 = vrot.slane %v416, 1
        %v418 = vadd.f32 %v416, %v417
        %v419 = vrot.slane %v393, 4
        %v420 = vadd.f32 %v393, %v419
        %v421 = vrot.slane %v420, 2
        %v422 = vadd.f32 %v420, %v421
        %v423 = vrot.slane %v422, 1
        %v424 = vadd.f32 %v422, %v423
        %v425 = vrot.slane %v394, 4
        %v426 = vadd.f32 %v394, %v425
        %v427 = vrot.slane %v426, 2
        %v428 = vadd.f32 %v426, %v427
        %v429 = vrot.slane %v428, 1
        %v430 = vadd.f32 %v428, %v429
        %v431 = vrot.slane %v395, 4
        %v432 = vadd.f32 %v395, %v431
        %v433 = vrot.slane %v432, 2
        %v434 = vadd.f32 %v432, %v433
        %v435 = vrot.slane %v434, 1
        %v436 = vadd.f32 %v434, %v435
        %v437 = vrot.slane %v396, 4
        %v438 = vadd.f32 %v396, %v437
        %v439 = vrot.slane %v438, 2
        %v440 = vadd.f32 %v438, %v439
        %v441 = vrot.slane %v440, 1
        %v442 = vadd.f32 %v440, %v441
        %v443 = vrot.slane %v397, 4
        %v444 = vadd.f32 %v397, %v443
        %v445 = vrot.slane %v444, 2
        %v446 = vadd.f32 %v444, %v445
        %v447 = vrot.slane %v446, 1
        %v448 = vadd.f32 %v446, %v447
        %v449 = vrot.slane %v398, 4
        %v450 = vadd.f32 %v398, %v449
        %v451 = vrot.slane %v450, 2
        %v452 = vadd.f32 %v450, %v451
        %v453 = vrot.slane %v452, 1
        %v454 = vadd.f32 %v452, %v453
        %v455 = vrot.slane %v399, 4
        %v456 = vadd.f32 %v399, %v455
        %v457 = vrot.slane %v456, 2
        %v458 = vadd.f32 %v456, %v457
        %v459 = vrot.slane %v458, 1
        %v460 = vadd.f32 %v458, %v459
        %v461 = vrot.slane %v400, 4
        %v462 = vadd.f32 %v400, %v461
        %v463 = vrot.slane %v462, 2
        %v464 = vadd.f32 %v462, %v463
        %v465 = vrot.slane %v464, 1
        %v466 = vadd.f32 %v464, %v465
        %v467 = vrot.slane %v401, 4
        %v468 = vadd.f32 %v401, %v467
        %v469 = vrot.slane %v468, 2
        %v470 = vadd.f32 %v468, %v469
        %v471 = vrot.slane %v470, 1
        %v472 = vadd.f32 %v470, %v471
        %v473 = vrot.slane %v402, 4
        %v474 = vadd.f32 %v402, %v473
        %v475 = vrot.slane %v474, 2
        %v476 = vadd.f32 %v474, %v475
        %v477 = vrot.slane %v476, 1
        %v478 = vadd.f32 %v476, %v477
        %v479 = vrot.slane %v403, 4
        %v480 = vadd.f32 %v403, %v479
        %v481 = vrot.slane %v480, 2
        %v482 = vadd.f32 %v480, %v481
        %v483 = vrot.slane %v482, 1
        %v484 = vadd.f32 %v482, %v483
        %v485 = vrot.slane %v404, 4
        %v486 = vadd.f32 %v404, %v485
        %v487 = vrot.slane %v486, 2
        %v488 = vadd.f32 %v486, %v487
        %v489 = vrot.slane %v488, 1
        %v490 = vadd.f32 %v488, %v489
        %v491 = vrot.slane %v405, 4
        %v492 = vadd.f32 %v405, %v491
        %v493 = vrot.slane %v492, 2
        %v494 = vadd.f32 %v492, %v493
        %v495 = vrot.slane %v494, 1
        %v496 = vadd.f32 %v494, %v495
        %v497 = vrot.slane %v406, 4
        %v498 = vadd.f32 %v406, %v497
        %v499 = vrot.slane %v498, 2
        %v500 = vadd.f32 %v498, %v499
        %v501 = vrot.slane %v500, 1
        %v502 = vadd.f32 %v500, %v501
        %v503 = vrcp.pop 8.0
        %v504 = vmul.f32 %v412, %v503
        %v505 = vmul.f32 %v418, %v503
        %v506 = vmul.f32 %v424, %v503
        %v507 = vmul.f32 %v430, %v503
        %v508 = vmul.f32 %v436, %v503
        %v509 = vmul.f32 %v442, %v503
        %v510 = vmul.f32 %v448, %v503
        %v511 = vmul.f32 %v454, %v503
        %v512 = vmul.f32 %v460, %v503
        %v513 = vmul.f32 %v466, %v503
        %v514 = vmul.f32 %v472, %v503
        %v515 = vmul.f32 %v478, %v503
        %v516 = vmul.f32 %v484, %v503
        %v517 = vmul.f32 %v490, %v503
        %v518 = vmul.f32 %v496, %v503
        %v519 = vmul.f32 %v502, %v503
        %vm536 = vcmask 1041409
        %v537 = vsel %vm536, %v505, %v504
        %vm538 = vcmask 1042434
        %v539 = vsel %vm538, %v506, %v537
        %vm540 = vcmask 1043459
        %v541 = vsel %vm540, %v507, %v539
        %vm542 = vcmask 1044484
        %v543 = vsel %vm542, %v508, %v541
        %vm544 = vcmask 1045509
        %v545 = vsel %vm544, %v509, %v543
        %vm546 = vcmask 1046534
        %v547 = vsel %vm546, %v510, %v545
        %vm548 = vcmask 1047559
        %v549 = vsel %vm548, %v511, %v547
        %v550 = vsel %vm536, %v513, %v512
        %v551 = vsel %vm538, %v514, %v550
        %v552 = vsel %vm540, %v515, %v551
        %v553 = vsel %vm542, %v516, %v552
        %v554 = vsel %vm544, %v517, %v553
        %v555 = vsel %vm546, %v518, %v554
        %v556 = vsel %vm548, %v519, %v555
        %559 = vst [vmem:[%s164] sm:$0xff] %v549
        %560 = vst [vmem:[%s164 + $0x8] sm:$0xff] %v556
        %s561 = sand.u32 %s93, 1
        %s562 = scalar_lea.sflag [#allocation3], %s561
        %s563 = sand.u32 %s93, 1
        %s564 = smul.addr %s563, 16
        %s565 = scalar_lea.vmem [#allocation2], %s564
        // Predicated region
        $region33: #{tpu_custom_call.1} parent=31 // pred_check
          %p566 = pneg %p103
        $region34: #{tpu_custom_call.1} parent=31 // pred_check_branch
          %568 = sbr.rel (%p566) target = $region36
        $region35: #{tpu_custom_call.1} parent=31 // pred_region
          %s569 = smul.u32 2, %s17
          %s571 = ssub.s32 256, 256
          %572 = vsyncadd %s562, %s571
          %s573 = smul.addr %s569, 128
          %s574 = scalar_lea.hbm %s3, %s573
          %s575 = sshll.u32 %s565, 4
          %s576 = int_to_ptr.vmem [resolvable:$true] %s575
          %581 = dma.vmem_to_hbm [thread:$0]  %s576, 256, %s574, %s562, 128, 128, 8
        $region36: #{tpu_custom_call.1} parent=31 // pred_fallthru
          _
      $region32: #{tpu_custom_call.1} parent=5 // pred_fallthru
        _
      %p582 = scmp.le.s32.totalorder 2, %s12
      // Predicated region
      $region37: #{tpu_custom_call.1} parent=5 // pred_check
        %p583 = pneg %p582
      $region38: #{tpu_custom_call.1} parent=5 // pred_check_branch
        %585 = sbr.rel (%p583) target = $region40
      $region39: #{tpu_custom_call.1} parent=5 // pred_region
        %s586 = ssub.s32 %s12, 2
        // Predicated region
        $region41: #{tpu_custom_call.1} parent=39 // pred_check
          %p587 = pneg %p109
        $region42: #{tpu_custom_call.1} parent=39 // pred_check_branch
          %589 = sbr.rel (%p587) target = $region44
        $region43: #{tpu_custom_call.1} parent=39 // pred_region
          %s590 = sand.u32 %s94, 1
          %s591 = scalar_lea.sflag [#allocation3], %s590
          %s592 = sand.u32 %s94, 1
          %s593 = smul.addr %s592, 16
          %s594 = scalar_lea.vmem [#allocation2], %s593
          %595 = dma.done %s591, 256
        $region44: #{tpu_custom_call.1} parent=39 // pred_fallthru
          _
      $region40: #{tpu_custom_call.1} parent=5 // pred_fallthru
        _
    $region6: #{tpu_custom_call.1} parent=1 // loop_footer
      %s16 = sadd.s32 1, %s12
    $region7: #{tpu_custom_call.1} parent=1 // loop_footer_branch
      %11 = sbr.rel target = $region3
    $region8: #{tpu_custom_call.1} parent=1 // loop_exit
      _
    %596 = vsyncpa [#allocation3], 1
    %s597 = scalar_lea.sflag [#allocation3], 1
    %598 = vsyncpa %s597, 1

</llo_original>
